<compile_context>
chip_gen: v7x
topology: tpu7x:2x2x1
jax: 0.10.0
libtpu: 0.0.40
codegen_flags: <defaults>
</compile_context>

<pallas_src>
import math

import jax
import jax.numpy as jnp
from jax.experimental import pallas as pl
from jax.experimental.pallas import tpu as pltpu


def _round_up(x, m):
    return ((x + m - 1) // m) * m


def _graphsage_score_kernel(w_ref, e_ref, out_ref):
    # w_ref:   (num_classes, embed_dim)  -- full weight, resident across all grid steps
    # e_ref:   (embed_dim, TILE_N)       -- one node tile of embeds (nodes on lane axis)
    # out_ref: (num_classes, TILE_N)     -- lane-dense output tile == (W @ E)[:, tile]
    out_ref[...] = jax.lax.dot_general(
        w_ref[...],
        e_ref[...],
        dimension_numbers=(((1,), (0,)), ((), ())),
        preferred_element_type=jnp.float32,
    ).astype(out_ref.dtype)


def _choose_node_tile(num_nodes, tile_n):
    """Largest lane-dense tile, but keep >= ~4 grid steps for v7x's 2 TCs."""
    if num_nodes <= 128:
        return 128
    # cap so the parallel grid has multiple steps to shard across TensorCores
    tile_for_steps = max(128, ((num_nodes // 4) // 128) * 128)
    tile = min(tile_n, tile_for_steps)
    # never larger than the node extent rounded to a lane multiple
    tile = min(tile, _round_up(num_nodes, 128))
    return max(tile, 128)


def graphsage_forward(weight, embeds, *, tile_n=8192):
    """weight: (num_classes, embed_dim), embeds: (embed_dim, num_nodes).
    Returns scores.t(): (num_nodes, num_classes) in float32.

    Compute runs in embeds.dtype (the encoder's output dtype); no wrapper-side
    cast of embeds is performed (that would cost a full extra HBM pass)."""
    num_classes, embed_dim = weight.shape
    embed_dim2, num_nodes = embeds.shape
    assert embed_dim == embed_dim2
    assert tile_n % 128 == 0, "node tile must be a multiple of 128 lanes"

    # Only the tiny weight is cast to the compute dtype (negligible).
    if weight.dtype != embeds.dtype:
        weight = weight.astype(embeds.dtype)
    itemsize = jnp.dtype(embeds.dtype).itemsize

    tile = _choose_node_tile(num_nodes, tile_n)
    grid = (pl.cdiv(num_nodes, tile),)

    # Per-step VMEM footprint (VMEM tiled layouts, double-buffered by Pallas),
    # with a modest safety factor; capped well below v7x's 64 MiB physical VMEM.
    w_vmem = _round_up(num_classes, 8) * _round_up(embed_dim, 128) * itemsize
    e_vmem = _round_up(embed_dim, 8) * tile * itemsize
    o_vmem = _round_up(num_classes, 8) * tile * 4
    vmem_need = 2 * (w_vmem + e_vmem + o_vmem)
    vmem_limit = int(min(24 * 1024 * 1024, max(2 * 1024 * 1024, 2 * vmem_need)))

    cost = pl.CostEstimate(
        flops=2 * num_nodes * embed_dim * num_classes,
        transcendentals=0,
        bytes_accessed=(
            num_classes * embed_dim * itemsize
            + embed_dim * num_nodes * itemsize
            + num_classes * num_nodes * 4
        ),
    )

    scores = pl.pallas_call(
        _graphsage_score_kernel,
        out_shape=jax.ShapeDtypeStruct((num_classes, num_nodes), jnp.float32),
        grid_spec=pl.GridSpec(
            grid=grid,
            in_specs=[
                # Full weight, resident (same block every step).
                pl.BlockSpec((num_classes, embed_dim), lambda i: (0, 0)),
                # Embeds node tiles; K kept un-tiled (full-extent block) -> no K pad
                # needed; ragged last node tile is masked by Pallas.
                pl.BlockSpec((embed_dim, tile), lambda i: (0, i)),
            ],
            out_specs=pl.BlockSpec((num_classes, tile), lambda i: (0, i)),
        ),
        compiler_params=pltpu.CompilerParams(
            dimension_semantics=("parallel",),
            vmem_limit_bytes=vmem_limit,
        ),
        cost_estimate=cost,
    )(weight, embeds)

    # scores: (num_classes, num_nodes).  Module returns scores.t().
    return scores.T


def xavier_uniform(key, shape, dtype=jnp.float32):
    # torch.nn.init.xavier_uniform_ on a (fan_out, fan_in) weight
    fan_out, fan_in = shape
    bound = math.sqrt(6.0 / (fan_in + fan_out))
    return jax.random.uniform(key, shape, dtype=dtype, minval=-bound, maxval=bound)


if __name__ == "__main__":
    key = jax.random.PRNGKey(0)
    k_w, k_e = jax.random.split(key)

    num_classes = 8
    embed_dim = 32
    num_nodes = 300   # not a multiple of 128 -> exercises ragged edge block (no padding)

    # Module parameter: self.weight (num_classes, embed_dim), xavier-uniform init.
    weight = xavier_uniform(k_w, (num_classes, embed_dim))

    # Simulated encoder output: (embed_dim, num_nodes) (graphsage-simple convention).
    embeds = jax.random.normal(k_e, (embed_dim, num_nodes), dtype=jnp.float32)

    # Reference: (weight.mm(embeds)).t()
    ref = (weight @ embeds).T

    scores_t = graphsage_forward(weight, embeds)
    scores_t = jax.block_until_ready(scores_t)
    assert scores_t.shape == (num_nodes, num_classes)
    assert scores_t.dtype == jnp.float32
    assert jnp.allclose(scores_t, ref, atol=1e-5, rtol=1e-5)

    print("KERNEL_OK")
</pallas_src>

<mosaic_0001>
module attributes {stable_mosaic.version = 11 : i64} {
  func.func @_graphsage_score_kernel(%arg0: i32, %arg1: memref<8x32xf32, #tpu.memory_space<vmem>>, %arg2: memref<32x128xf32, #tpu.memory_space<vmem>>, %arg3: memref<8x128xf32, #tpu.memory_space<vmem>>) attributes {dimension_semantics = [#tpu.dimension_semantics<parallel>], iteration_bounds = array<i64: 3>, scalar_prefetch = 0 : i64, scratch_operands = 0 : i64, tpu.core_type = #tpu.core_type<tc>, window_params = [{pipeline_mode = #tpu.pipeline_mode<synchronous>, transform_indices = @transform_0, window_bounds = array<i64: 8, 32>}, {transform_indices = @transform_1, window_bounds = array<i64: 32, 128>}, {transform_indices = @transform_2, window_bounds = array<i64: 8, 128>}]} {
    %c0 = arith.constant 0 : index
    %c0_0 = arith.constant 0 : index
    %0 = vector.load %arg1[%c0, %c0_0] : memref<8x32xf32, #tpu.memory_space<vmem>>, vector<8x32xf32>
    %c0_1 = arith.constant 0 : index
    %c0_2 = arith.constant 0 : index
    %1 = vector.load %arg2[%c0_1, %c0_2] : memref<32x128xf32, #tpu.memory_space<vmem>>, vector<32x128xf32>
    %cst = arith.constant dense<0.000000e+00> : vector<8x128xf32>
    %2 = tpu.matmul %0, %1, %cst {dimension_numbers = #tpu.dot_dimension_numbers<[1], [0], [0], [1], [0, 0, 1, 1], [], []>} : vector<8x32xf32>, vector<32x128xf32>, vector<8x128xf32> -> vector<8x128xf32>
    %c0_3 = arith.constant 0 : index
    %c0_4 = arith.constant 0 : index
    %3 = vector.load %arg3[%c0_3, %c0_4] : memref<8x128xf32, #tpu.memory_space<vmem>>, vector<8x128xf32>
    tpu.vector_store %arg3[%c0_3, %c0_4], %2 {strides = array<i32>} : memref<8x128xf32, #tpu.memory_space<vmem>>, vector<8x128xf32>,
    return
  }
  func.func @transform_0(%arg0: i32) -> (i32, i32) {
    %c0_i32 = arith.constant 0 : i32
    %c0_i32_0 = arith.constant 0 : i32
    %c0_i32_1 = arith.constant 0 : i32
    return %c0_i32, %c0_i32_0 : i32, i32
  }
  func.func @transform_1(%arg0: i32) -> (i32, i32) {
    %c0_i32 = arith.constant 0 : i32
    %c0_i32_0 = arith.constant 0 : i32
    return %c0_i32, %arg0 : i32, i32
  }
  func.func @transform_2(%arg0: i32) -> (i32, i32) {
    %c0_i32 = arith.constant 0 : i32
    %c0_i32_0 = arith.constant 0 : i32
    return %c0_i32, %arg0 : i32, i32
  }
}

</mosaic_0001>

<llo_original>
// kernel: tpu_custom_call.1
$region0: #{tpu_custom_call.1}
  #allocation0 [shape = 'u32[]', space=smem, size = 0x4, offset = 0x4, fixed_abs, tag = 'smem constant byte address 0x4 - core index']
  #allocation1 [shape = 'u32[144,128]{1,0:T(1,128)}', space=vmem, size = 0x12000, scoped, tag = 'internal scratch']
  %s0 = inlined_call_operand.hbm [shape: f32[8,32], index: 0, kind: input, shape index: {}]
  %s1 = inlined_call_operand.hbm [shape: f32[32,300], index: 1, kind: input, shape index: {}]
  %s2 = inlined_call_operand.hbm [shape: f32[8,300], index: 2, kind: output, shape index: {}]
  %s3 = sld [smem:[#allocation0]]
  $region49: #{tpu_custom_call.1} parent=0
    _
  %s5 = ssub.s32 1, %s3
  %s6 = scalar_select 0, %s5, %s3
  $region1: #{tpu_custom_call.1} parent=0
    #allocation2 [shape = 'u8[4096]{0}', space=vmem, size = 0x1000, scoped, tag = 'input window, operand 0, single buffered']
    #allocation3 [shape = 's32[2]{0}', space=sflag, size = 0x8, scoped, tag = 'scoped memory for tpu_custom_call.1']
    #allocation4 [shape = 's32[2]{0}', space=sflag, size = 0x8, scoped, tag = 'scoped memory for tpu_custom_call.1']
    #allocation5 [shape = 'u8[32768]{0}', space=vmem, size = 0x8000, scoped, tag = 'input window, operand 1']
    #allocation6 [shape = 's32[2]{0}', space=sflag, size = 0x8, scoped, tag = 'scoped memory for tpu_custom_call.1']
    #allocation7 [shape = 'u8[8192]{0}', space=vmem, size = 0x2000, scoped, tag = 'output window, operand 0']
    %7 = vsyncpa [#allocation3], 0
    %8 = vsyncpa [#allocation6], 0
    %s9 = scalar_lea.sflag [#allocation6], 1
    %10 = vsyncpa %s9, 0
    %11 = vsyncpa [#allocation4], 0
    %s12 = scalar_lea.sflag [#allocation4], 1
    %13 = vsyncpa %s12, 0
    loop: start=0, step=1, limit=5
    $region2: #{tpu_custom_call.1} parent=1 // loop_pre_header
      _
    $region3: #{tpu_custom_call.1} parent=1 // loop_header
      %s15 = sphi 0, %s19
      %p16 = scmp.ge.s32.totalorder %s15, 5
      %s23 = sphi 0, %s23
      %s25 = sphi 0, %s23
      %s26 = sphi 0, %s25
      %s40 = sphi 0, %s26
      %s46 = sphi 0, %s48
      %s49 = sphi 0, %s46
      %s50 = sphi 0, %s49
      %s66 = sphi 0, %s50
      %s72 = sphi 0, %s74
      %s75 = sphi 0, %s72
      %s76 = sphi 0, %s75
      %s92 = sphi 0, %s76
    $region4: #{tpu_custom_call.1} parent=1 // loop_header_branch
      %18 = sbr.rel (%p16) target = $region8
    $region5: #{tpu_custom_call.1} parent=1 // loop_body
      %s20 = ssub.s32 %s15, 1
      %s21 = ssub.s32 %s15, 2
      %s22 = sadd.s32 %s15, 1
      %s24 = sadd.s32 %s23, 1
      %p27 = scmp.eq.s32.totalorder %s15, 2
      %p28 = scmp.ne.s32.totalorder %s23, %s25
      %p29 = scmp.eq.s32.totalorder %s15, 0
      %p30 = por %p28, %p29
      %p31 = scmp.ne.s32.totalorder %s23, %s25
      %p32 = scmp.eq.s32.totalorder %s20, 2
      %p33 = por %p31, %p32
      %p34 = scmp.ne.s32.totalorder %s25, %s26
      %p35 = scmp.eq.s32.totalorder %s20, 0
      %p36 = por %p34, %p35
      %p37 = scmp.ne.s32.totalorder %s25, %s26
      %p38 = scmp.eq.s32.totalorder %s21, 2
      %p39 = por %p37, %p38
      %p41 = scmp.ne.s32.totalorder %s26, %s40
      %p42 = scmp.eq.s32.totalorder %s21, 0
      %p43 = por %p41, %p42
      %s44 = ssub.s32 %s15, %s22
      %p45 = scmp.eq.s32.totalorder %s44, 0
      %s47 = sadd.s32 %s46, 1
      %s48 = scalar_select %p45, %s46, %s47
      %p51 = pneg %p45
      %p52 = scmp.eq.s32.totalorder %s15, 2
      %p53 = por %p51, %p52
      %p54 = scmp.ne.s32.totalorder %s46, %s49
      %p55 = scmp.eq.s32.totalorder %s15, 0
      %p56 = por %p54, %p55
      %p57 = scmp.ne.s32.totalorder %s46, %s49
      %p58 = scmp.eq.s32.totalorder %s20, 2
      %p59 = por %p57, %p58
      %p60 = scmp.ne.s32.totalorder %s49, %s50
      %p61 = scmp.eq.s32.totalorder %s20, 0
      %p62 = por %p60, %p61
      %p63 = scmp.ne.s32.totalorder %s49, %s50
      %p64 = scmp.eq.s32.totalorder %s21, 2
      %p65 = por %p63, %p64
      %p67 = scmp.ne.s32.totalorder %s50, %s66
      %p68 = scmp.eq.s32.totalorder %s21, 0
      %p69 = por %p67, %p68
      %s70 = ssub.s32 %s15, %s22
      %p71 = scmp.eq.s32.totalorder %s70, 0
      %s73 = sadd.s32 %s72, 1
      %s74 = scalar_select %p71, %s72, %s73
      %p77 = pneg %p71
      %p78 = scmp.eq.s32.totalorder %s15, 2
      %p79 = por %p77, %p78
      %p80 = scmp.ne.s32.totalorder %s72, %s75
      %p81 = scmp.eq.s32.totalorder %s15, 0
      %p82 = por %p80, %p81
      %p83 = scmp.ne.s32.totalorder %s72, %s75
      %p84 = scmp.eq.s32.totalorder %s20, 2
      %p85 = por %p83, %p84
      %p86 = scmp.ne.s32.totalorder %s75, %s76
      %p87 = scmp.eq.s32.totalorder %s20, 0
      %p88 = por %p86, %p87
      %p89 = scmp.ne.s32.totalorder %s75, %s76
      %p90 = scmp.eq.s32.totalorder %s21, 2
      %p91 = por %p89, %p90
      %p93 = scmp.ne.s32.totalorder %s76, %s92
      %p94 = scmp.eq.s32.totalorder %s21, 0
      %p95 = por %p93, %p94
      %p96 = scmp.le.s32.totalorder 1, %s15
      %p97 = scmp.lt.s32.totalorder %s15, 4
      %p98 = pnand %p96, %p97
      %p99 = pneg %p98
      // Predicated region
      $region9: #{tpu_custom_call.1} parent=5 // pred_check
        _
      $region10: #{tpu_custom_call.1} parent=5 // pred_check_branch
        %101 = sbr.rel (%p98) target = $region12
      $region11: #{tpu_custom_call.1} parent=5 // pred_region
        %s102 = ssub.s32 %s15, 1
        // Predicated region
        $region13: #{tpu_custom_call.1} parent=11 // pred_check
          %p103 = pneg %p36
        $region14: #{tpu_custom_call.1} parent=11 // pred_check_branch
          %105 = sbr.rel (%p103) target = $region16
        $region15: #{tpu_custom_call.1} parent=11 // pred_region
          %s107 = ssub.s32 128, 128
          %108 = vsyncadd [#allocation3], %s107
          %s110 = sshll.u32 [#allocation2], 4
          %s111 = int_to_ptr.vmem [resolvable:$true] %s110
          %113 = dma.hbm_to_vmem [thread:$0]  %s0, 128, %s111, [#allocation3]
        $region16: #{tpu_custom_call.1} parent=11 // pred_fallthru
          _
      $region12: #{tpu_custom_call.1} parent=5 // pred_fallthru
        _
      %p114 = scmp.lt.s32.totalorder %s15, 3
      // Predicated region
      $region17: #{tpu_custom_call.1} parent=5 // pred_check
        %p115 = pneg %p114
      $region18: #{tpu_custom_call.1} parent=5 // pred_check_branch
        %117 = sbr.rel (%p115) target = $region20
      $region19: #{tpu_custom_call.1} parent=5 // pred_region
        // Predicated region
        $region21: #{tpu_custom_call.1} parent=19 // pred_check
          %p118 = pneg %p56
        $region22: #{tpu_custom_call.1} parent=19 // pred_check_branch
          %120 = sbr.rel (%p118) target = $region24
        $region23: #{tpu_custom_call.1} parent=19 // pred_region
          %s121 = sand.u32 %s46, 1
          %s122 = scalar_lea.sflag [#allocation6], %s121
          %s123 = sand.u32 %s46, 1
          %s124 = smul.addr %s123, 32
          %s125 = scalar_lea.vmem [#allocation5], %s124
          %s127 = ssub.s32 512, 512
          %128 = vsyncadd %s122, %s127
          %s129 = smul.addr %s15, 128
          %s130 = scalar_lea.hbm %s1, %s129
          %s131 = sshll.u32 %s125, 4
          %s132 = int_to_ptr.vmem [resolvable:$true] %s131
          %137 = dma.hbm_to_vmem [thread:$0]  %s130, 512, %s132, %s122, 384, 128, 8
        $region24: #{tpu_custom_call.1} parent=19 // pred_fallthru
          _
      $region20: #{tpu_custom_call.1} parent=5 // pred_fallthru
        _
      %p138 = scmp.le.s32.totalorder 1, %s15
      %p139 = scmp.lt.s32.totalorder %s15, 4
      %p140 = pnand %p138, %p139
      %p141 = pneg %p140
      // Predicated region
      $region25: #{tpu_custom_call.1} parent=5 // pred_check
        _
      $region26: #{tpu_custom_call.1} parent=5 // pred_check_branch
        %143 = sbr.rel (%p140) target = $region28
      $region27: #{tpu_custom_call.1} parent=5 // pred_region
        %s144 = ssub.s32 %s15, 1
        // Predicated region
        $region29: #{tpu_custom_call.1} parent=27 // pred_check
          %p145 = pneg %p36
        $region30: #{tpu_custom_call.1} parent=27 // pred_check_branch
          %147 = sbr.rel (%p145) target = $region32
        $region31: #{tpu_custom_call.1} parent=27 // pred_region
          %148 = dma.done [#allocation3], 128
        $region32: #{tpu_custom_call.1} parent=27 // pred_fallthru
          _
        %s149 = sand.u32 %s49, 1
        %s150 = scalar_lea.sflag [#allocation6], %s149
        %s151 = sand.u32 %s49, 1
        %s152 = smul.addr %s151, 32
        %s153 = scalar_lea.vmem [#allocation5], %s152
        // Predicated region
        $region33: #{tpu_custom_call.1} parent=27 // pred_check
          %p154 = pneg %p62
        $region34: #{tpu_custom_call.1} parent=27 // pred_check_branch
          %156 = sbr.rel (%p154) target = $region36
        $region35: #{tpu_custom_call.1} parent=27 // pred_region
          %157 = dma.done %s150, 512
        $region36: #{tpu_custom_call.1} parent=27 // pred_fallthru
          _
        %p158 = pneg %p36
        %p159 = pneg %p33
        %s160 = sand.u32 %s49, 1
        %s161 = scalar_lea.sflag [#allocation6], %s160
        %s162 = sand.u32 %s49, 1
        %s163 = smul.addr %s162, 32
        %s164 = scalar_lea.vmem [#allocation5], %s163
        %p165 = pneg %p62
        %p166 = pneg %p59
        %p167 = pneg %p88
        %p168 = pneg %p85
        %s169 = sand.u32 %s75, 1
        %s170 = scalar_lea.sflag [#allocation4], %s169
        %s171 = sand.u32 %s75, 1
        %s172 = smul.addr %s171, 8
        %s173 = scalar_lea.vmem [#allocation7], %s172
        %v174 = vld [vmem:[#allocation2] sm:$0xff]
        %v175 = vld [vmem:[%s153] sm:$0xff]
        %v176 = vld [vmem:[%s153 + $0x8] sm:$0xff]
        %v177 = vld [vmem:[%s153 + $0x10] sm:$0xff]
        %v178 = vld [vmem:[%s153 + $0x18] sm:$0xff]
        %vm179 = vcmask 261120
        %v181 = vsel %vm179, %v174, 0
        %183 = vmatprep.subr.mxu0 0.0
        %184 = vmatpush1.msra.mxu0 %v175
        %185 = vmatprep.subr.mxu0 0.0
        %186 = vmatpush1.msra.mxu0 %v176
        %187 = vmatprep.subr.mxu0 0.0
        %188 = vmatpush1.msra.mxu0 %v177
        %189 = vmatprep.subr.mxu0 0.0
        %190 = vmatpush1.msra.mxu0 %v178
        %191 = vmatprep.subr.mxu0 0.0
        %192 = vmatpush1.msra.mxu0 0.0
        %193 = vmatprep.subr.mxu0 0.0
        %194 = vmatpush1.msra.mxu0 0.0
        %195 = vmatprep.subr.mxu0 0.0
        %196 = vmatpush1.msra.mxu0 0.0
        %197 = vmatprep.subr.mxu0 0.0
        %198 = vmatpush1.msra.mxu0 0.0
        %199 = vmatprep.subr.mxu0 0.0
        %200 = vmatpush1.msra.mxu0 0.0
        %201 = vmatprep.subr.mxu0 0.0
        %202 = vmatpush1.msra.mxu0 0.0
        %203 = vmatprep.subr.mxu0 0.0
        %204 = vmatpush1.msra.mxu0 0.0
        %205 = vmatprep.subr.mxu0 0.0
        %206 = vmatpush1.msra.mxu0 0.0
        %207 = vmatprep.subr.mxu0 0.0
        %208 = vmatpush1.msra.mxu0 0.0
        %209 = vmatprep.subr.mxu0 0.0
        %210 = vmatpush1.msra.mxu0 0.0
        %211 = vmatprep.subr.mxu0 0.0
        %212 = vmatpush1.msra.mxu0 0.0
        %213 = vmatprep.subr.mxu0 0.0
        %214 = vmatpush1.msra.mxu0 0.0
        %215 = vmatprep.subr.mxu0 0.0
        %216 = vmatpush1.msra.mxu0 0.0
        %217 = vmatprep.subr.mxu0 0.0
        %218 = vmatpush1.msra.mxu0 0.0
        %219 = vmatprep.subr.mxu0 0.0
        %220 = vmatpush1.msra.mxu0 0.0
        %221 = vmatprep.subr.mxu0 0.0
        %222 = vmatpush1.msra.mxu0 0.0
        %223 = vmatprep.subr.mxu0 0.0
        %224 = vmatpush1.msra.mxu0 0.0
        %225 = vmatprep.subr.mxu0 0.0
        %226 = vmatpush1.msra.mxu0 0.0
        %227 = vmatprep.subr.mxu0 0.0
        %228 = vmatpush1.msra.mxu0 0.0
        %229 = vmatprep.subr.mxu0 0.0
        %230 = vmatpush1.msra.mxu0 0.0
        %231 = vmatprep.subr.mxu0 0.0
        %232 = vmatpush1.msra.mxu0 0.0
        %233 = vmatprep.subr.mxu0 0.0
        %234 = vmatpush1.msra.mxu0 0.0
        %235 = vmatprep.subr.mxu0 0.0
        %236 = vmatpush1.msra.mxu0 0.0
        %237 = vmatprep.subr.mxu0 0.0
        %238 = vmatpush1.msra.mxu0 0.0
        %239 = vmatprep.subr.mxu0 0.0
        %240 = vmatpush1.msra.mxu0 0.0
        %241 = vmatprep.subr.mxu0 0.0
        %242 = vmatpush1.msra.mxu0 0.0
        %243 = vmatprep.subr.mxu0 0.0
        %244 = vmatpush1.msra.mxu0 0.0
        %245 = vmatprep.subr.mxu0 0.0
        %246 = vmatpush1.msra.mxu0 0.0
        %247 = vmatprep.mubr.f32.mxu0 0.0
        %248 = vmatmul.mubr.f32.gmra.mrb[0].mxu0 %v181
        %v249 = vpop.f32.mrb[0].mxu0
        %v250 = vadd.f32 0.0, %v249
        %v251 = vpop.f32.mrb[0].mxu0
        %252 = vdwg.mxu0
        %253 = vst [vmem:[%s173] sm:$0xff] %v250
        %s254 = sand.u32 %s75, 1
        %s255 = scalar_lea.sflag [#allocation4], %s254
        %s256 = sand.u32 %s75, 1
        %s257 = smul.addr %s256, 8
        %s258 = scalar_lea.vmem [#allocation7], %s257
        // Predicated region
        $region37: #{tpu_custom_call.1} parent=27 // pred_check
          %p259 = pneg %p85
        $region38: #{tpu_custom_call.1} parent=27 // pred_check_branch
          %261 = sbr.rel (%p259) target = $region40
        $region39: #{tpu_custom_call.1} parent=27 // pred_region
          %s263 = ssub.s32 128, 128
          %264 = vsyncadd %s255, %s263
          %s265 = smul.addr %s20, 128
          %s266 = scalar_lea.hbm %s2, %s265
          %s268 = sshll.u32 %s258, 4
          %s269 = int_to_ptr.vmem [resolvable:$true] %s268
          %271 = dma.vmem_to_hbm [thread:$0]  %s269, 128, %s266, %s255
        $region40: #{tpu_custom_call.1} parent=27 // pred_fallthru
          _
      $region28: #{tpu_custom_call.1} parent=5 // pred_fallthru
        _
      %p272 = scmp.le.s32.totalorder 2, %s15
      // Predicated region
      $region41: #{tpu_custom_call.1} parent=5 // pred_check
        %p273 = pneg %p272
      $region42: #{tpu_custom_call.1} parent=5 // pred_check_branch
        %275 = sbr.rel (%p273) target = $region44
      $region43: #{tpu_custom_call.1} parent=5 // pred_region
        %s276 = ssub.s32 %s15, 2
        // Predicated region
        $region45: #{tpu_custom_call.1} parent=43 // pred_check
          %p277 = pneg %p91
        $region46: #{tpu_custom_call.1} parent=43 // pred_check_branch
          %279 = sbr.rel (%p277) target = $region48
        $region47: #{tpu_custom_call.1} parent=43 // pred_region
          %s280 = sand.u32 %s76, 1
          %s281 = scalar_lea.sflag [#allocation4], %s280
          %s282 = sand.u32 %s76, 1
          %s283 = smul.addr %s282, 8
          %s284 = scalar_lea.vmem [#allocation7], %s283
          %285 = dma.done %s281, 128
        $region48: #{tpu_custom_call.1} parent=43 // pred_fallthru
          _
      $region44: #{tpu_custom_call.1} parent=5 // pred_fallthru
        _
    $region6: #{tpu_custom_call.1} parent=1 // loop_footer
      %s19 = sadd.s32 1, %s15
    $region7: #{tpu_custom_call.1} parent=1 // loop_footer_branch
      %14 = sbr.rel target = $region3
    $region8: #{tpu_custom_call.1} parent=1 // loop_exit
      _
    %286 = vsyncpa [#allocation3], 1
    %s287 = scalar_lea.sflag [#allocation3], 1
    %288 = vsyncpa %s287, 1
    %289 = vsyncpa [#allocation6], 1
    %s290 = scalar_lea.sflag [#allocation6], 1
    %291 = vsyncpa %s290, 1
    %292 = vsyncpa [#allocation4], 1
    %s293 = scalar_lea.sflag [#allocation4], 1
    %294 = vsyncpa %s293, 1

</llo_original>
